<compile_context>
chip_gen: v7x
topology: tpu7x:2x2x1
jax: 0.10.0
libtpu: 0.0.40
codegen_flags: <defaults>
</compile_context>

<pallas_src>
import functools
import math

import jax
import jax.numpy as jnp
from jax.experimental import pallas as pl
from jax.experimental.pallas import tpu as pltpu

_PROJ_DIM = 64   # per-head output width (PyTorch: Linear(H, 64))
_OPAD = 128      # region output padded to a full lane group (unmasked stores)


# ----------------------------------------------------------------------------
# Kernel: grid over the columns of w_cat = [Wg_flat | W1].
# ----------------------------------------------------------------------------
def _fused_projector_kernel(x_ref, wcat_ref, w2_ref, gene_ref, region_ref,
                            acc_ref, *, n_gene):
    # x:      (B, H)        resident in VMEM (constant index_map)
    # wcat:   (H, TN)       streamed column tile of [Wg_flat | W1]
    # w2:     (TN, OPAD)    rows of padded W2 matching this W1 column tile
    # gene:   (B, TN)       lane-dense gene output tile
    # region: (B, OPAD)     resident output block (written on the last step)
    # acc:    (B, OPAD) f32 region accumulator scratch
    n = pl.program_id(0)
    n_last = pl.num_programs(0) - 1

    # First-layer tile on the MXU, f32 accumulation; ReLU on the f32 result
    # (both heads apply ReLU right after their first matmul).
    s = jnp.dot(x_ref[...], wcat_ref[...], preferred_element_type=jnp.float32)
    s = jnp.maximum(s, 0.0)

    @pl.when(n == 0)
    def _init():
        acc_ref[...] = jnp.zeros_like(acc_ref)

    # Gene column tiles: store lane-dense (TN is a multiple of 128).
    @pl.when(n < n_gene)
    def _gene():
        gene_ref[...] = s.astype(gene_ref.dtype)

    # W1 column tiles: region second matmul against the matching W2 rows.
    @pl.when(n >= n_gene)
    def _region():
        acc_ref[...] += jnp.dot(s.astype(w2_ref.dtype), w2_ref[...],
                                preferred_element_type=jnp.float32)

    @pl.when(n == n_last)
    def _store_region():
        region_ref[...] = acc_ref[...].astype(region_ref.dtype)


# ----------------------------------------------------------------------------
# One-time weight layout preparation (hoisted out of the per-call hot path).
# ----------------------------------------------------------------------------
def prepare_projector_params(params, compute_dtype=jnp.float32):
    w1 = params["w_region1"]            # (H, H)   stored as (in, out)
    w2 = params["w_region2"]            # (H, 64)
    wg = params["w_genes"]              # (G, H, 64)
    G, H, O = wg.shape
    assert O == _PROJ_DIM
    assert w1.shape == (H, H) and w2.shape == (H, O)

    # Gene columns first so the gene / W1 split lands on a 128-lane boundary.
    wg_flat = jnp.transpose(wg, (1, 0, 2)).reshape(H, G * O)            # (H, G*O)
    w_cat = jnp.concatenate([wg_flat, w1], axis=1).astype(compute_dtype)
    w2_pad = jnp.pad(w2, ((0, 0), (0, _OPAD - O))).astype(compute_dtype)
    return {
        "w_cat": w_cat,          # (H, G*O + H)
        "w2_pad": w2_pad,        # (H, 128)
        "num_genes": G,
        "hidden_dim": H,
        "compute_dtype": compute_dtype,
    }


def _pick_col_tile(go, h, target=512):
    """Largest 128-multiple <= target that divides both G*O and H."""
    g = math.gcd(go, h)
    if g % 128 != 0:
        # TODO(synk): pad G*O / H to 128-multiples for arbitrary hidden dims.
        raise ValueError(f"G*64={go} and H={h} must share a 128-multiple tile")
    tn = (min(target, g) // 128) * 128
    while g % tn != 0:
        tn -= 128
    return tn


# ----------------------------------------------------------------------------
# Forward wrapper (hot path — no weight reshuffling here).
# ----------------------------------------------------------------------------
def contrastive_projectors_forward(features, prepared):
    """Mirrors ContrastiveProjectors.forward -> (region_features, gene_features)."""
    x = features
    B, H = x.shape
    assert H == prepared["hidden_dim"]
    G = prepared["num_genes"]
    O = _PROJ_DIM
    go = G * O
    w_cat = prepared["w_cat"]
    w2_pad = prepared["w2_pad"]
    compute_dtype = prepared["compute_dtype"]
    out_dtype = x.dtype

    tn = _pick_col_tile(go, H)
    n_gene = go // tn
    n_total = (go + H) // tn

    x_c = x.astype(compute_dtype)

    itm = jnp.dtype(compute_dtype).itemsize
    oitm = jnp.dtype(out_dtype).itemsize
    vmem_bytes = (
        2 * (H * tn + tn * _OPAD) * itm          # double-buffered weight tiles
        + B * H * itm                            # resident x
        + 2 * B * tn * oitm + B * _OPAD * oitm   # output buffers
        + B * _OPAD * 4                          # f32 accumulator scratch
    )
    vmem_limit = min(128 * 1024 * 1024, max(32 * 1024 * 1024, 2 * vmem_bytes))

    flops = 2 * B * H * (go + H) + 2 * B * H * _OPAD
    bytes_accessed = int((x_c.size + w_cat.size + w2_pad.size) * itm
                         + (B * go + B * _OPAD) * oitm)

    gene_flat, region_pad = pl.pallas_call(
        functools.partial(_fused_projector_kernel, n_gene=n_gene),
        out_shape=(
            jax.ShapeDtypeStruct((B, go), out_dtype),
            jax.ShapeDtypeStruct((B, _OPAD), out_dtype),
        ),
        grid=(n_total,),
        in_specs=[
            pl.BlockSpec((B, H), lambda n: (0, 0)),              # x: resident
            pl.BlockSpec((H, tn), lambda n: (0, n)),             # weight stream
            pl.BlockSpec((tn, _OPAD),
                         lambda n: (jnp.maximum(n - n_gene, 0), 0)),  # W2 rows
        ],
        out_specs=(
            pl.BlockSpec((B, tn), lambda n: (0, jnp.minimum(n, n_gene - 1))),
            pl.BlockSpec((B, _OPAD), lambda n: (0, 0)),          # resident
        ),
        scratch_shapes=[pltpu.VMEM((B, _OPAD), jnp.float32)],
        compiler_params=pltpu.CompilerParams(
            dimension_semantics=("arbitrary",),
            vmem_limit_bytes=int(vmem_limit),
        ),
        cost_estimate=pl.CostEstimate(
            flops=flops, transcendentals=0, bytes_accessed=bytes_accessed),
    )(x_c, w_cat, w2_pad)

    region = region_pad[:, :O]                                # (B, 64)
    genes = gene_flat.reshape(B, G, O).transpose(1, 0, 2)     # (G, B, 64)
    return region, genes


# ----------------------------------------------------------------------------
# Deterministic parameter init (synthetic, not a checkpoint load)
# ----------------------------------------------------------------------------
def init_params(key, hidden_dim, num_genes, proj_dim=64, dtype=jnp.float32):
    k1, k2, k3 = jax.random.split(key, 3)
    scale = 0.05
    return {
        # stored as (in, out) — equivalent to torch Linear weight transposed
        "w_region1": scale * jax.random.normal(k1, (hidden_dim, hidden_dim), dtype),
        "w_region2": scale * jax.random.normal(k2, (hidden_dim, proj_dim), dtype),
        "w_genes": scale * jax.random.normal(k3, (num_genes, hidden_dim, proj_dim), dtype),
    }


# ----------------------------------------------------------------------------
# Main
# ----------------------------------------------------------------------------
if __name__ == "__main__":
    B = 8        # batch of feature vectors
    H = 256      # hidden_dim (128-multiple so the column tiling is exercised)
    G = 4        # len(gene_list)  -> G*64 = 256 gene columns

    key = jax.random.PRNGKey(0)
    kx, kp = jax.random.split(key)
    features = jax.random.normal(kx, (B, H), jnp.float32)
    params = init_params(kp, H, G)

    # Pure-JAX reference (same math as the PyTorch module, bias=False).
    ref_region = jnp.maximum(features @ params["w_region1"], 0.0) @ params["w_region2"]
    ref_genes = jnp.maximum(
        jnp.einsum("bh,gho->gbo", features, params["w_genes"]), 0.0)

    # ---- f32 operands: bit-for-bit check ------------------------------------
    prep_f32 = prepare_projector_params(params, compute_dtype=jnp.float32)
    region32, genes32 = contrastive_projectors_forward(features, prep_f32)
    jax.block_until_ready((region32, genes32))
    assert region32.shape == (B, 64)
    assert genes32.shape == (G, B, 64)
    assert jnp.allclose(region32, ref_region, atol=1e-5)
    assert jnp.allclose(genes32, ref_genes, atol=1e-5)

    # ---- bf16 matmul operands (f32 accumulation): halves HBM weight stream --
    prep_bf16 = prepare_projector_params(params, compute_dtype=jnp.bfloat16)
    region16, genes16 = contrastive_projectors_forward(features, prep_bf16)
    jax.block_until_ready((region16, genes16))
    assert jnp.allclose(region16, ref_region, atol=5e-2, rtol=5e-2)
    assert jnp.allclose(genes16, ref_genes, atol=5e-2, rtol=5e-2)

    print("KERNEL_OK")
</pallas_src>

<mosaic_0001>
module attributes {stable_mosaic.version = 11 : i64} {
  func.func @_fused_projector_kernel(%arg0: i32, %arg1: memref<8x256xf32, #tpu.memory_space<vmem>>, %arg2: memref<256x256xf32, #tpu.memory_space<vmem>>, %arg3: memref<256x128xf32, #tpu.memory_space<vmem>>, %arg4: memref<8x256xf32, #tpu.memory_space<vmem>>, %arg5: memref<8x128xf32, #tpu.memory_space<vmem>>, %arg6: memref<8x128xf32, #tpu.memory_space<vmem>>) attributes {dimension_semantics = [#tpu.dimension_semantics<arbitrary>], iteration_bounds = array<i64: 2>, scalar_prefetch = 0 : i64, scratch_operands = 1 : i64, tpu.core_type = #tpu.core_type<tc>, window_params = [{pipeline_mode = #tpu.pipeline_mode<synchronous>, transform_indices = @transform_0, window_bounds = array<i64: 8, 256>}, {transform_indices = @transform_1, window_bounds = array<i64: 256, 256>}, {transform_indices = @transform_2, window_bounds = array<i64: 256, 128>}, {transform_indices = @transform_3, window_bounds = array<i64: 8, 256>}, {pipeline_mode = #tpu.pipeline_mode<synchronous>, transform_indices = @transform_4, window_bounds = array<i64: 8, 128>}]} {
    %c0 = arith.constant 0 : index
    %c0_0 = arith.constant 0 : index
    %0 = vector.load %arg1[%c0, %c0_0] : memref<8x256xf32, #tpu.memory_space<vmem>>, vector<8x256xf32>
    %c0_1 = arith.constant 0 : index
    %c0_2 = arith.constant 0 : index
    %1 = vector.load %arg2[%c0_1, %c0_2] : memref<256x256xf32, #tpu.memory_space<vmem>>, vector<256x256xf32>
    %cst = arith.constant dense<0.000000e+00> : vector<8x256xf32>
    %2 = tpu.matmul %0, %1, %cst {dimension_numbers = #tpu.dot_dimension_numbers<[1], [0], [0], [1], [0, 0, 1, 1], [], []>} : vector<8x256xf32>, vector<256x256xf32>, vector<8x256xf32> -> vector<8x256xf32>
    %cst_3 = arith.constant 0.000000e+00 : f32
    %3 = vector.broadcast %cst_3 : f32 to vector<8x256xf32>
    %4 = arith.maximumf %2, %3 : vector<8x256xf32>
    %c0_i32 = arith.constant 0 : i32
    %5 = arith.cmpi eq, %arg0, %c0_i32 : i32
    %6 = arith.extui %5 : i1 to i32
    %c0_i32_4 = arith.constant 0 : i32
    %7 = arith.cmpi ne, %6, %c0_i32_4 : i32
    scf.if %7 {
      %cst_10 = arith.constant 0.000000e+00 : f32
      %17 = vector.broadcast %cst_10 : f32 to vector<8x128xf32>
      %c0_11 = arith.constant 0 : index
      %c0_12 = arith.constant 0 : index
      %18 = vector.load %arg6[%c0_11, %c0_12] : memref<8x128xf32, #tpu.memory_space<vmem>>, vector<8x128xf32>
      tpu.vector_store %arg6[%c0_11, %c0_12], %17 {strides = array<i32>} : memref<8x128xf32, #tpu.memory_space<vmem>>, vector<8x128xf32>,
    } else {
    }
    %c1_i32 = arith.constant 1 : i32
    %8 = arith.cmpi slt, %arg0, %c1_i32 : i32
    %9 = arith.extui %8 : i1 to i32
    %c0_i32_5 = arith.constant 0 : i32
    %10 = arith.cmpi ne, %9, %c0_i32_5 : i32
    scf.if %10 {
      %c0_10 = arith.constant 0 : index
      %c0_11 = arith.constant 0 : index
      %17 = vector.load %arg4[%c0_10, %c0_11] : memref<8x256xf32, #tpu.memory_space<vmem>>, vector<8x256xf32>
      tpu.vector_store %arg4[%c0_10, %c0_11], %4 {strides = array<i32>} : memref<8x256xf32, #tpu.memory_space<vmem>>, vector<8x256xf32>,
    } else {
    }
    %c1_i32_6 = arith.constant 1 : i32
    %11 = arith.cmpi sge, %arg0, %c1_i32_6 : i32
    %12 = arith.extui %11 : i1 to i32
    %c0_i32_7 = arith.constant 0 : i32
    %13 = arith.cmpi ne, %12, %c0_i32_7 : i32
    scf.if %13 {
      %c0_10 = arith.constant 0 : index
      %c0_11 = arith.constant 0 : index
      %17 = vector.load %arg6[%c0_10, %c0_11] : memref<8x128xf32, #tpu.memory_space<vmem>>, vector<8x128xf32>
      %c0_12 = arith.constant 0 : index
      %c0_13 = arith.constant 0 : index
      %18 = vector.load %arg3[%c0_12, %c0_13] : memref<256x128xf32, #tpu.memory_space<vmem>>, vector<256x128xf32>
      %cst_14 = arith.constant dense<0.000000e+00> : vector<8x128xf32>
      %19 = tpu.matmul %4, %18, %cst_14 {dimension_numbers = #tpu.dot_dimension_numbers<[1], [0], [0], [1], [0, 0, 1, 1], [], []>} : vector<8x256xf32>, vector<256x128xf32>, vector<8x128xf32> -> vector<8x128xf32>
      %20 = arith.addf %17, %19 : vector<8x128xf32>
      %c0_15 = arith.constant 0 : index
      %c0_16 = arith.constant 0 : index
      %21 = vector.load %arg6[%c0_15, %c0_16] : memref<8x128xf32, #tpu.memory_space<vmem>>, vector<8x128xf32>
      tpu.vector_store %arg6[%c0_15, %c0_16], %20 {strides = array<i32>} : memref<8x128xf32, #tpu.memory_space<vmem>>, vector<8x128xf32>,
    } else {
    }
    %c1_i32_8 = arith.constant 1 : i32
    %14 = arith.cmpi eq, %arg0, %c1_i32_8 : i32
    %15 = arith.extui %14 : i1 to i32
    %c0_i32_9 = arith.constant 0 : i32
    %16 = arith.cmpi ne, %15, %c0_i32_9 : i32
    scf.if %16 {
      %c0_10 = arith.constant 0 : index
      %c0_11 = arith.constant 0 : index
      %17 = vector.load %arg6[%c0_10, %c0_11] : memref<8x128xf32, #tpu.memory_space<vmem>>, vector<8x128xf32>
      %c0_12 = arith.constant 0 : index
      %c0_13 = arith.constant 0 : index
      %18 = vector.load %arg5[%c0_12, %c0_13] : memref<8x128xf32, #tpu.memory_space<vmem>>, vector<8x128xf32>
      tpu.vector_store %arg5[%c0_12, %c0_13], %17 {strides = array<i32>} : memref<8x128xf32, #tpu.memory_space<vmem>>, vector<8x128xf32>,
    } else {
    }
    return
  }
  func.func @transform_0(%arg0: i32) -> (i32, i32) {
    %c0_i32 = arith.constant 0 : i32
    %c0_i32_0 = arith.constant 0 : i32
    %c0_i32_1 = arith.constant 0 : i32
    return %c0_i32, %c0_i32_0 : i32, i32
  }
  func.func @transform_1(%arg0: i32) -> (i32, i32) {
    %c0_i32 = arith.constant 0 : i32
    %c0_i32_0 = arith.constant 0 : i32
    return %c0_i32, %arg0 : i32, i32
  }
  func.func @transform_2(%arg0: i32) -> (i32, i32) {
    %c1_i32 = arith.constant 1 : i32
    %0 = arith.subi %arg0, %c1_i32 : i32
    %c0_i32 = arith.constant 0 : i32
    %1 = arith.maxsi %0, %c0_i32 : i32
    %c0_i32_0 = arith.constant 0 : i32
    %c0_i32_1 = arith.constant 0 : i32
    return %1, %c0_i32_0 : i32, i32
  }
  func.func @transform_3(%arg0: i32) -> (i32, i32) {
    %c0_i32 = arith.constant 0 : i32
    %0 = arith.minsi %arg0, %c0_i32 : i32
    %c0_i32_0 = arith.constant 0 : i32
    %c0_i32_1 = arith.constant 0 : i32
    return %c0_i32_0, %0 : i32, i32
  }
  func.func @transform_4(%arg0: i32) -> (i32, i32) {
    %c0_i32 = arith.constant 0 : i32
    %c0_i32_0 = arith.constant 0 : i32
    %c0_i32_1 = arith.constant 0 : i32
    return %c0_i32, %c0_i32_0 : i32, i32
  }
}

</mosaic_0001>

<llo_original>
// kernel: tpu_custom_call.1
$region0: #{tpu_custom_call.1}
  #allocation0 [shape = 'u32[]', space=smem, size = 0x4, offset = 0x4, fixed_abs, tag = 'smem constant byte address 0x4 - core index']
  #allocation1 [shape = 'u32[144,128]{1,0:T(1,128)}', space=vmem, size = 0x12000, scoped, tag = 'internal scratch']
  #allocation2 [shape = 'f32[8,128]{1,0:T(8,128)}', space=vmem, size = 0x1000, scoped, tag = 'scratch operand']
  %s0 = inlined_call_operand.hbm [shape: f32[8,256], index: 0, kind: input, shape index: {}]
  %s1 = inlined_call_operand.hbm [shape: f32[256,512], index: 1, kind: input, shape index: {}]
  %s2 = inlined_call_operand.hbm [shape: f32[256,128], index: 2, kind: input, shape index: {}]
  %s3 = inlined_call_operand.hbm [shape: f32[8,256], index: 3, kind: output, shape index: {0}]
  %s4 = inlined_call_operand.hbm [shape: f32[8,128], index: 4, kind: output, shape index: {1}]
  %5 = xla_tuple %s3, %s4
  %s6 = sld [smem:[#allocation0]]
  $region81: #{tpu_custom_call.1} parent=0
    _
  %s8 = ssub.s32 1, %s6
  %s9 = scalar_select 0, %s8, %s6
  $region1: #{tpu_custom_call.1} parent=0
    #allocation3 [shape = 'u8[8192]{0}', space=vmem, size = 0x2000, scoped, tag = 'input window, operand 0, single buffered']
    #allocation4 [shape = 's32[2]{0}', space=sflag, size = 0x8, scoped, tag = 'scoped memory for tpu_custom_call.1']
    #allocation5 [shape = 's32[2]{0}', space=sflag, size = 0x8, scoped, tag = 'scoped memory for tpu_custom_call.1']
    #allocation6 [shape = 'u8[524288]{0}', space=vmem, size = 0x80000, scoped, tag = 'input window, operand 1']
    #allocation7 [shape = 's32[2]{0}', space=sflag, size = 0x8, scoped, tag = 'scoped memory for tpu_custom_call.1']
    #allocation8 [shape = 'u8[262144]{0}', space=vmem, size = 0x40000, scoped, tag = 'input window, operand 2']
    #allocation9 [shape = 'u8[16384]{0}', space=vmem, size = 0x4000, scoped, tag = 'output window, operand 0']
    #allocation10 [shape = 'u8[4096]{0}', space=vmem, size = 0x1000, scoped, tag = 'output window, operand 1, single buffered']
    #allocation11 [shape = 's32[1]{0}', space=sflag, size = 0x4, scoped, tag = 'scoped memory for tpu_custom_call.1']
    %10 = vsyncpa [#allocation4], 0
    %11 = vsyncpa [#allocation7], 0
    %s12 = scalar_lea.sflag [#allocation7], 1
    %13 = vsyncpa %s12, 0
    %14 = vsyncpa [#allocation5], 0
    %s15 = scalar_lea.sflag [#allocation5], 1
    %16 = vsyncpa %s15, 0
    %17 = vsyncpa [#allocation11], 0
    loop: start=0, step=1, limit=4
    $region2: #{tpu_custom_call.1} parent=1 // loop_pre_header
      _
    $region3: #{tpu_custom_call.1} parent=1 // loop_header
      %s19 = sphi 0, %s23
      %p20 = scmp.ge.s32.totalorder %s19, 4
      %s27 = sphi 0, %s27
      %s29 = sphi 0, %s27
      %s30 = sphi 0, %s29
      %s44 = sphi 0, %s30
      %s50 = sphi 0, %s52
      %s53 = sphi 0, %s50
      %s54 = sphi 0, %s53
      %s70 = sphi 0, %s54
      %s82 = sphi 0, %s84
      %s85 = sphi 0, %s82
      %s86 = sphi 0, %s85
      %s102 = sphi 0, %s86
      %s112 = sphi 0, %s114
      %s115 = sphi 0, %s112
      %s116 = sphi 0, %s115
      %s132 = sphi 0, %s116
      %s136 = sphi 0, %s136
      %s138 = sphi 0, %s136
      %s139 = sphi 0, %s138
      %s153 = sphi 0, %s139
    $region4: #{tpu_custom_call.1} parent=1 // loop_header_branch
      %22 = sbr.rel (%p20) target = $region8
    $region5: #{tpu_custom_call.1} parent=1 // loop_body
      %s24 = ssub.s32 %s19, 1
      %s25 = ssub.s32 %s19, 2
      %s26 = sadd.s32 %s19, 1
      %s28 = sadd.s32 %s27, 1
      %p31 = scmp.eq.s32.totalorder %s19, 1
      %p32 = scmp.ne.s32.totalorder %s27, %s29
      %p33 = scmp.eq.s32.totalorder %s19, 0
      %p34 = por %p32, %p33
      %p35 = scmp.ne.s32.totalorder %s27, %s29
      %p36 = scmp.eq.s32.totalorder %s24, 1
      %p37 = por %p35, %p36
      %p38 = scmp.ne.s32.totalorder %s29, %s30
      %p39 = scmp.eq.s32.totalorder %s24, 0
      %p40 = por %p38, %p39
      %p41 = scmp.ne.s32.totalorder %s29, %s30
      %p42 = scmp.eq.s32.totalorder %s25, 1
      %p43 = por %p41, %p42
      %p45 = scmp.ne.s32.totalorder %s30, %s44
      %p46 = scmp.eq.s32.totalorder %s25, 0
      %p47 = por %p45, %p46
      %s48 = ssub.s32 %s19, %s26
      %p49 = scmp.eq.s32.totalorder %s48, 0
      %s51 = sadd.s32 %s50, 1
      %s52 = scalar_select %p49, %s50, %s51
      %p55 = pneg %p49
      %p56 = scmp.eq.s32.totalorder %s19, 1
      %p57 = por %p55, %p56
      %p58 = scmp.ne.s32.totalorder %s50, %s53
      %p59 = scmp.eq.s32.totalorder %s19, 0
      %p60 = por %p58, %p59
      %p61 = scmp.ne.s32.totalorder %s50, %s53
      %p62 = scmp.eq.s32.totalorder %s24, 1
      %p63 = por %p61, %p62
      %p64 = scmp.ne.s32.totalorder %s53, %s54
      %p65 = scmp.eq.s32.totalorder %s24, 0
      %p66 = por %p64, %p65
      %p67 = scmp.ne.s32.totalorder %s53, %s54
      %p68 = scmp.eq.s32.totalorder %s25, 1
      %p69 = por %p67, %p68
      %p71 = scmp.ne.s32.totalorder %s54, %s70
      %p72 = scmp.eq.s32.totalorder %s25, 0
      %p73 = por %p71, %p72
      %s74 = ssub.s32 %s19, 1
      %p75 = scmp.gt.s32.totalorder %s74, 0
      %s76 = scalar_select %p75, %s74, 0
      %s77 = ssub.s32 %s26, 1
      %p78 = scmp.gt.s32.totalorder %s77, 0
      %s79 = scalar_select %p78, %s77, 0
      %s80 = ssub.s32 %s76, %s79
      %p81 = scmp.eq.s32.totalorder %s80, 0
      %s83 = sadd.s32 %s82, 1
      %s84 = scalar_select %p81, %s82, %s83
      %p87 = pneg %p81
      %p88 = scmp.eq.s32.totalorder %s19, 1
      %p89 = por %p87, %p88
      %p90 = scmp.ne.s32.totalorder %s82, %s85
      %p91 = scmp.eq.s32.totalorder %s19, 0
      %p92 = por %p90, %p91
      %p93 = scmp.ne.s32.totalorder %s82, %s85
      %p94 = scmp.eq.s32.totalorder %s24, 1
      %p95 = por %p93, %p94
      %p96 = scmp.ne.s32.totalorder %s85, %s86
      %p97 = scmp.eq.s32.totalorder %s24, 0
      %p98 = por %p96, %p97
      %p99 = scmp.ne.s32.totalorder %s85, %s86
      %p100 = scmp.eq.s32.totalorder %s25, 1
      %p101 = por %p99, %p100
      %p103 = scmp.ne.s32.totalorder %s86, %s102
      %p104 = scmp.eq.s32.totalorder %s25, 0
      %p105 = por %p103, %p104
      %p106 = scmp.lt.s32.totalorder %s19, 0
      %s107 = scalar_select %p106, %s19, 0
      %p108 = scmp.lt.s32.totalorder %s26, 0
      %s109 = scalar_select %p108, %s26, 0
      %s110 = ssub.s32 %s107, %s109
      %p111 = scmp.eq.s32.totalorder %s110, 0
      %s113 = sadd.s32 %s112, 1
      %s114 = scalar_select %p111, %s112, %s113
      %p117 = pneg %p111
      %p118 = scmp.eq.s32.totalorder %s19, 1
      %p119 = por %p117, %p118
      %p120 = scmp.ne.s32.totalorder %s112, %s115
      %p121 = scmp.eq.s32.totalorder %s19, 0
      %p122 = por %p120, %p121
      %p123 = scmp.ne.s32.totalorder %s112, %s115
      %p124 = scmp.eq.s32.totalorder %s24, 1
      %p125 = por %p123, %p124
      %p126 = scmp.ne.s32.totalorder %s115, %s116
      %p127 = scmp.eq.s32.totalorder %s24, 0
      %p128 = por %p126, %p127
      %p129 = scmp.ne.s32.totalorder %s115, %s116
      %p130 = scmp.eq.s32.totalorder %s25, 1
      %p131 = por %p129, %p130
      %p133 = scmp.ne.s32.totalorder %s116, %s132
      %p134 = scmp.eq.s32.totalorder %s25, 0
      %p135 = por %p133, %p134
      %s137 = sadd.s32 %s136, 1
      %p140 = scmp.eq.s32.totalorder %s19, 1
      %p141 = scmp.ne.s32.totalorder %s136, %s138
      %p142 = scmp.eq.s32.totalorder %s19, 0
      %p143 = por %p141, %p142
      %p144 = scmp.ne.s32.totalorder %s136, %s138
      %p145 = scmp.eq.s32.totalorder %s24, 1
      %p146 = por %p144, %p145
      %p147 = scmp.ne.s32.totalorder %s138, %s139
      %p148 = scmp.eq.s32.totalorder %s24, 0
      %p149 = por %p147, %p148
      %p150 = scmp.ne.s32.totalorder %s138, %s139
      %p151 = scmp.eq.s32.totalorder %s25, 1
      %p152 = por %p150, %p151
      %p154 = scmp.ne.s32.totalorder %s139, %s153
      %p155 = scmp.eq.s32.totalorder %s25, 0
      %p156 = por %p154, %p155
      %p157 = scmp.le.s32.totalorder 1, %s19
      %p158 = scmp.lt.s32.totalorder %s19, 3
      %p159 = pnand %p157, %p158
      %p160 = pneg %p159
      // Predicated region
      $region9: #{tpu_custom_call.1} parent=5 // pred_check
        _
      $region10: #{tpu_custom_call.1} parent=5 // pred_check_branch
        %162 = sbr.rel (%p159) target = $region12
      $region11: #{tpu_custom_call.1} parent=5 // pred_region
        %s163 = ssub.s32 %s19, 1
        // Predicated region
        $region13: #{tpu_custom_call.1} parent=11 // pred_check
          %p164 = pneg %p40
        $region14: #{tpu_custom_call.1} parent=11 // pred_check_branch
          %166 = sbr.rel (%p164) target = $region16
        $region15: #{tpu_custom_call.1} parent=11 // pred_region
          %s168 = ssub.s32 256, 256
          %169 = vsyncadd [#allocation4], %s168
          %s171 = sshll.u32 [#allocation3], 4
          %s172 = int_to_ptr.vmem [resolvable:$true] %s171
          %174 = dma.hbm_to_vmem [thread:$0]  %s0, 256, %s172, [#allocation4]
        $region16: #{tpu_custom_call.1} parent=11 // pred_fallthru
          _
      $region12: #{tpu_custom_call.1} parent=5 // pred_fallthru
        _
      %p175 = scmp.lt.s32.totalorder %s19, 2
      // Predicated region
      $region17: #{tpu_custom_call.1} parent=5 // pred_check
        %p176 = pneg %p175
      $region18: #{tpu_custom_call.1} parent=5 // pred_check_branch
        %178 = sbr.rel (%p176) target = $region20
      $region19: #{tpu_custom_call.1} parent=5 // pred_region
        // Predicated region
        $region21: #{tpu_custom_call.1} parent=19 // pred_check
          %p179 = pneg %p60
        $region22: #{tpu_custom_call.1} parent=19 // pred_check_branch
          %181 = sbr.rel (%p179) target = $region24
        $region23: #{tpu_custom_call.1} parent=19 // pred_region
          %s182 = sand.u32 %s19, 1
          %s183 = scalar_lea.sflag [#allocation7], %s182
          %s184 = sand.u32 %s50, 1
          %s185 = smul.addr %s184, 512
          %s186 = scalar_lea.vmem [#allocation6], %s185
          %s187 = smul.u32 2, %s19
          %s189 = ssub.s32 8192, 8192
          %190 = vsyncadd %s183, %s189
          %s191 = smul.addr %s187, 128
          %s192 = scalar_lea.hbm %s1, %s191
          %s193 = sshll.u32 %s186, 4
          %s194 = int_to_ptr.vmem [resolvable:$true] %s193
          %199 = dma.hbm_to_vmem [thread:$0]  %s192, 8192, %s194, %s183, 512, 256, 16
        $region24: #{tpu_custom_call.1} parent=19 // pred_fallthru
          _
        // Predicated region
        $region25: #{tpu_custom_call.1} parent=19 // pred_check
          %p200 = pneg %p92
        $region26: #{tpu_custom_call.1} parent=19 // pred_check_branch
          %202 = sbr.rel (%p200) target = $region28
        $region27: #{tpu_custom_call.1} parent=19 // pred_region
          %s203 = sand.u32 %s19, 1
          %s204 = scalar_lea.sflag [#allocation7], %s203
          %s205 = sand.u32 %s82, 1
          %s206 = smul.addr %s205, 256
          %s207 = scalar_lea.vmem [#allocation8], %s206
          %s208 = ssub.s32 %s19, 1
          %p209 = scmp.gt.s32.totalorder %s208, 0
          %s210 = scalar_select %p209, %s208, 0
          %s211 = smul.u32 32, %s210
          %s213 = ssub.s32 4096, 4096
          %214 = vsyncadd %s204, %s213
          %s215 = smul.addr %s211, 128
          %s216 = scalar_lea.hbm %s2, %s215
          %s217 = sshll.u32 %s207, 4
          %s218 = int_to_ptr.vmem [resolvable:$true] %s217
          %223 = dma.hbm_to_vmem [thread:$0]  %s216, 4096, %s218, %s204, 128, 128, 8
        $region28: #{tpu_custom_call.1} parent=19 // pred_fallthru
          _
      $region20: #{tpu_custom_call.1} parent=5 // pred_fallthru
        _
      %p224 = scmp.le.s32.totalorder 1, %s19
      %p225 = scmp.lt.s32.totalorder %s19, 3
      %p226 = pnand %p224, %p225
      %p227 = pneg %p226
      // Predicated region
      $region29: #{tpu_custom_call.1} parent=5 // pred_check
        _
      $region30: #{tpu_custom_call.1} parent=5 // pred_check_branch
        %229 = sbr.rel (%p226) target = $region32
      $region31: #{tpu_custom_call.1} parent=5 // pred_region
        %s230 = ssub.s32 %s19, 1
        // Predicated region
        $region33: #{tpu_custom_call.1} parent=31 // pred_check
          %p231 = pneg %p40
        $region34: #{tpu_custom_call.1} parent=31 // pred_check_branch
          %233 = sbr.rel (%p231) target = $region36
        $region35: #{tpu_custom_call.1} parent=31 // pred_region
          %234 = dma.done [#allocation4], 256
        $region36: #{tpu_custom_call.1} parent=31 // pred_fallthru
          _
        %s235 = sand.u32 %s24, 1
        %s236 = scalar_lea.sflag [#allocation7], %s235
        %s237 = sand.u32 %s53, 1
        %s238 = smul.addr %s237, 512
        %s239 = scalar_lea.vmem [#allocation6], %s238
        // Predicated region
        $region37: #{tpu_custom_call.1} parent=31 // pred_check
          %p240 = pneg %p66
        $region38: #{tpu_custom_call.1} parent=31 // pred_check_branch
          %242 = sbr.rel (%p240) target = $region40
        $region39: #{tpu_custom_call.1} parent=31 // pred_region
          %243 = dma.done %s236, 8192
        $region40: #{tpu_custom_call.1} parent=31 // pred_fallthru
          _
        %s244 = sand.u32 %s24, 1
        %s245 = scalar_lea.sflag [#allocation7], %s244
        %s246 = sand.u32 %s85, 1
        %s247 = smul.addr %s246, 256
        %s248 = scalar_lea.vmem [#allocation8], %s247
        // Predicated region
        $region41: #{tpu_custom_call.1} parent=31 // pred_check
          %p249 = pneg %p98
        $region42: #{tpu_custom_call.1} parent=31 // pred_check_branch
          %251 = sbr.rel (%p249) target = $region44
        $region43: #{tpu_custom_call.1} parent=31 // pred_region
          %252 = dma.done %s245, 4096
        $region44: #{tpu_custom_call.1} parent=31 // pred_fallthru
          _
        %p253 = pneg %p40
        %p254 = pneg %p37
        %s255 = sand.u32 %s24, 1
        %s256 = scalar_lea.sflag [#allocation7], %s255
        %s257 = sand.u32 %s53, 1
        %s258 = smul.addr %s257, 512
        %s259 = scalar_lea.vmem [#allocation6], %s258
        %p260 = pneg %p66
        %p261 = pneg %p63
        %s262 = sand.u32 %s24, 1
        %s263 = scalar_lea.sflag [#allocation7], %s262
        %s264 = sand.u32 %s85, 1
        %s265 = smul.addr %s264, 256
        %s266 = scalar_lea.vmem [#allocation8], %s265
        %p267 = pneg %p98
        %p268 = pneg %p95
        %p269 = pneg %p128
        %p270 = pneg %p125
        %s271 = sand.u32 %s115, 1
        %s272 = scalar_lea.sflag [#allocation5], %s271
        %s273 = sand.u32 %s115, 1
        %s274 = smul.addr %s273, 16
        %s275 = scalar_lea.vmem [#allocation9], %s274
        %p276 = pneg %p149
        %p277 = pneg %p146
        %s278 = smul.u32 2, %s24
        %s279 = ssub.s32 %s24, 1
        %p280 = scmp.gt.s32.totalorder %s279, 0
        %s281 = scalar_select %p280, %s279, 0
        %s282 = smul.u32 32, %s281
        %p283 = scmp.lt.s32.totalorder %s24, 0
        %s284 = scalar_select %p283, %s24, 0
        %s285 = smul.u32 2, %s284
        %v286 = vld [vmem:[#allocation3] sm:$0xff]
        %v287 = vld [vmem:[#allocation3 + $0x8] sm:$0xff]
        %v288 = vld [vmem:[%s239] sm:$0xff]
        %v289 = vld [vmem:[%s239 + $0x8] sm:$0xff]
        %v290 = vld [vmem:[%s239 + $0x10] sm:$0xff]
        %v291 = vld [vmem:[%s239 + $0x18] sm:$0xff]
        %v292 = vld [vmem:[%s239 + $0x20] sm:$0xff]
        %v293 = vld [vmem:[%s239 + $0x28] sm:$0xff]
        %v294 = vld [vmem:[%s239 + $0x30] sm:$0xff]
        %v295 = vld [vmem:[%s239 + $0x38] sm:$0xff]
        %v296 = vld [vmem:[%s239 + $0x40] sm:$0xff]
        %v297 = vld [vmem:[%s239 + $0x48] sm:$0xff]
        %v298 = vld [vmem:[%s239 + $0x50] sm:$0xff]
        %v299 = vld [vmem:[%s239 + $0x58] sm:$0xff]
        %v300 = vld [vmem:[%s239 + $0x60] sm:$0xff]
        %v301 = vld [vmem:[%s239 + $0x68] sm:$0xff]
        %v302 = vld [vmem:[%s239 + $0x70] sm:$0xff]
        %v303 = vld [vmem:[%s239 + $0x78] sm:$0xff]
        %v304 = vld [vmem:[%s239 + $0x80] sm:$0xff]
        %v305 = vld [vmem:[%s239 + $0x88] sm:$0xff]
        %v306 = vld [vmem:[%s239 + $0x90] sm:$0xff]
        %v307 = vld [vmem:[%s239 + $0x98] sm:$0xff]
        %v308 = vld [vmem:[%s239 + $0xa0] sm:$0xff]
        %v309 = vld [vmem:[%s239 + $0xa8] sm:$0xff]
        %v310 = vld [vmem:[%s239 + $0xb0] sm:$0xff]
        %v311 = vld [vmem:[%s239 + $0xb8] sm:$0xff]
        %v312 = vld [vmem:[%s239 + $0xc0] sm:$0xff]
        %v313 = vld [vmem:[%s239 + $0xc8] sm:$0xff]
        %v314 = vld [vmem:[%s239 + $0xd0] sm:$0xff]
        %v315 = vld [vmem:[%s239 + $0xd8] sm:$0xff]
        %v316 = vld [vmem:[%s239 + $0xe0] sm:$0xff]
        %v317 = vld [vmem:[%s239 + $0xe8] sm:$0xff]
        %v318 = vld [vmem:[%s239 + $0xf0] sm:$0xff]
        %v319 = vld [vmem:[%s239 + $0xf8] sm:$0xff]
        %v320 = vld [vmem:[%s239 + $0x100] sm:$0xff]
        %v321 = vld [vmem:[%s239 + $0x108] sm:$0xff]
        %v322 = vld [vmem:[%s239 + $0x110] sm:$0xff]
        %v323 = vld [vmem:[%s239 + $0x118] sm:$0xff]
        %v324 = vld [vmem:[%s239 + $0x120] sm:$0xff]
        %v325 = vld [vmem:[%s239 + $0x128] sm:$0xff]
        %v326 = vld [vmem:[%s239 + $0x130] sm:$0xff]
        %v327 = vld [vmem:[%s239 + $0x138] sm:$0xff]
        %v328 = vld [vmem:[%s239 + $0x140] sm:$0xff]
        %v329 = vld [vmem:[%s239 + $0x148] sm:$0xff]
        %v330 = vld [vmem:[%s239 + $0x150] sm:$0xff]
        %v331 = vld [vmem:[%s239 + $0x158] sm:$0xff]
        %v332 = vld [vmem:[%s239 + $0x160] sm:$0xff]
        %v333 = vld [vmem:[%s239 + $0x168] sm:$0xff]
        %v334 = vld [vmem:[%s239 + $0x170] sm:$0xff]
        %v335 = vld [vmem:[%s239 + $0x178] sm:$0xff]
        %v336 = vld [vmem:[%s239 + $0x180] sm:$0xff]
        %v337 = vld [vmem:[%s239 + $0x188] sm:$0xff]
        %v338 = vld [vmem:[%s239 + $0x190] sm:$0xff]
        %v339 = vld [vmem:[%s239 + $0x198] sm:$0xff]
        %v340 = vld [vmem:[%s239 + $0x1a0] sm:$0xff]
        %v341 = vld [vmem:[%s239 + $0x1a8] sm:$0xff]
        %v342 = vld [vmem:[%s239 + $0x1b0] sm:$0xff]
        %v343 = vld [vmem:[%s239 + $0x1b8] sm:$0xff]
        %v344 = vld [vmem:[%s239 + $0x1c0] sm:$0xff]
        %v345 = vld [vmem:[%s239 + $0x1c8] sm:$0xff]
        %v346 = vld [vmem:[%s239 + $0x1d0] sm:$0xff]
        %v347 = vld [vmem:[%s239 + $0x1d8] sm:$0xff]
        %v348 = vld [vmem:[%s239 + $0x1e0] sm:$0xff]
        %v349 = vld [vmem:[%s239 + $0x1e8] sm:$0xff]
        %v350 = vld [vmem:[%s239 + $0x1f0] sm:$0xff]
        %v351 = vld [vmem:[%s239 + $0x1f8] sm:$0xff]
        %352 = vmatprep.subr.mxu0 %v289
        %353 = vmatpush1.msra.mxu0 %v288
        %354 = vmatprep.subr.mxu0 %v291
        %355 = vmatpush1.msra.mxu0 %v290
        %356 = vmatprep.subr.mxu0 %v293
        %357 = vmatpush1.msra.mxu0 %v292
        %358 = vmatprep.subr.mxu0 %v295
        %359 = vmatpush1.msra.mxu0 %v294
        %360 = vmatprep.subr.mxu0 %v297
        %361 = vmatpush1.msra.mxu0 %v296
        %362 = vmatprep.subr.mxu0 %v299
        %363 = vmatpush1.msra.mxu0 %v298
        %364 = vmatprep.subr.mxu0 %v301
        %365 = vmatpush1.msra.mxu0 %v300
        %366 = vmatprep.subr.mxu0 %v303
        %367 = vmatpush1.msra.mxu0 %v302
        %368 = vmatprep.subr.mxu0 %v305
        %369 = vmatpush1.msra.mxu0 %v304
        %370 = vmatprep.subr.mxu0 %v307
        %371 = vmatpush1.msra.mxu0 %v306
        %372 = vmatprep.subr.mxu0 %v309
        %373 = vmatpush1.msra.mxu0 %v308
        %374 = vmatprep.subr.mxu0 %v311
        %375 = vmatpush1.msra.mxu0 %v310
        %376 = vmatprep.subr.mxu0 %v313
        %377 = vmatpush1.msra.mxu0 %v312
        %378 = vmatprep.subr.mxu0 %v315
        %379 = vmatpush1.msra.mxu0 %v314
        %380 = vmatprep.subr.mxu0 %v317
        %381 = vmatpush1.msra.mxu0 %v316
        %382 = vmatprep.subr.mxu0 %v319
        %383 = vmatpush1.msra.mxu0 %v318
        %384 = vmatprep.subr.mxu0 %v321
        %385 = vmatpush1.msra.mxu0 %v320
        %386 = vmatprep.subr.mxu0 %v323
        %387 = vmatpush1.msra.mxu0 %v322
        %388 = vmatprep.subr.mxu0 %v325
        %389 = vmatpush1.msra.mxu0 %v324
        %390 = vmatprep.subr.mxu0 %v327
        %391 = vmatpush1.msra.mxu0 %v326
        %392 = vmatprep.subr.mxu0 %v329
        %393 = vmatpush1.msra.mxu0 %v328
        %394 = vmatprep.subr.mxu0 %v331
        %395 = vmatpush1.msra.mxu0 %v330
        %396 = vmatprep.subr.mxu0 %v333
        %397 = vmatpush1.msra.mxu0 %v332
        %398 = vmatprep.subr.mxu0 %v335
        %399 = vmatpush1.msra.mxu0 %v334
        %400 = vmatprep.subr.mxu0 %v337
        %401 = vmatpush1.msra.mxu0 %v336
        %402 = vmatprep.subr.mxu0 %v339
        %403 = vmatpush1.msra.mxu0 %v338
        %404 = vmatprep.subr.mxu0 %v341
        %405 = vmatpush1.msra.mxu0 %v340
        %406 = vmatprep.subr.mxu0 %v343
        %407 = vmatpush1.msra.mxu0 %v342
        %408 = vmatprep.subr.mxu0 %v345
        %409 = vmatpush1.msra.mxu0 %v344
        %410 = vmatprep.subr.mxu0 %v347
        %411 = vmatpush1.msra.mxu0 %v346
        %412 = vmatprep.subr.mxu0 %v349
        %413 = vmatpush1.msra.mxu0 %v348
        %414 = vmatprep.subr.mxu0 %v351
        %415 = vmatpush1.msra.mxu0 %v350
        %416 = vmatprep.mubr.f32.mxu0 %v287
        %417 = vmatmul.mubr.f32.gmra.mrb[0].mxu0 %v286
        %v418 = vpop.f32.mrb[0].mxu0
        %v419 = vadd.f32 0.0, %v418
        %v420 = vpop.f32.mrb[0].mxu0
        %v421 = vadd.f32 0.0, %v420
        %422 = vdwg.mxu0
        %v423 = vmax.f32 %v419, 0.0
        %v424 = vmax.f32 %v421, 0.0
        %p425 = scmp.eq.s32.totalorder %s24, 0
        // Predicated region
        $region45: #{tpu_custom_call.1} parent=31 // pred_check
          %p426 = pneg %p425
        $region46: #{tpu_custom_call.1} parent=31 // pred_check_branch
          %428 = sbr.rel (%p426) target = $region48
        $region47: #{tpu_custom_call.1} parent=31 // pred_region
          %429 = vst [vmem:[#allocation2] sm:$0xff] 0.0
        $region48: #{tpu_custom_call.1} parent=31 // pred_fallthru
          _
        %p430 = scmp.lt.s32.totalorder %s24, 1
        // Predicated region
        $region49: #{tpu_custom_call.1} parent=31 // pred_check
          %p431 = pneg %p430
        $region50: #{tpu_custom_call.1} parent=31 // pred_check_branch
          %433 = sbr.rel (%p431) target = $region52
        $region51: #{tpu_custom_call.1} parent=31 // pred_region
          %434 = vst [vmem:[%s275] sm:$0xff] %v423
          %435 = vst [vmem:[%s275 + $0x8] sm:$0xff] %v424
        $region52: #{tpu_custom_call.1} parent=31 // pred_fallthru
          _
        %p436 = scmp.ge.s32.totalorder %s24, 1
        // Predicated region
        $region53: #{tpu_custom_call.1} parent=31 // pred_check
          %p437 = pneg %p436
        $region54: #{tpu_custom_call.1} parent=31 // pred_check_branch
          %439 = sbr.rel (%p437) target = $region56
        $region55: #{tpu_custom_call.1} parent=31 // pred_region
          %v440 = vld [vmem:[#allocation2] sm:$0xff]
          %v441 = vld [vmem:[%s248] sm:$0xff]
          %v442 = vld [vmem:[%s248 + $0x8] sm:$0xff]
          %v443 = vld [vmem:[%s248 + $0x10] sm:$0xff]
          %v444 = vld [vmem:[%s248 + $0x18] sm:$0xff]
          %v445 = vld [vmem:[%s248 + $0x20] sm:$0xff]
          %v446 = vld [vmem:[%s248 + $0x28] sm:$0xff]
          %v447 = vld [vmem:[%s248 + $0x30] sm:$0xff]
          %v448 = vld [vmem:[%s248 + $0x38] sm:$0xff]
          %v449 = vld [vmem:[%s248 + $0x40] sm:$0xff]
          %v450 = vld [vmem:[%s248 + $0x48] sm:$0xff]
          %v451 = vld [vmem:[%s248 + $0x50] sm:$0xff]
          %v452 = vld [vmem:[%s248 + $0x58] sm:$0xff]
          %v453 = vld [vmem:[%s248 + $0x60] sm:$0xff]
          %v454 = vld [vmem:[%s248 + $0x68] sm:$0xff]
          %v455 = vld [vmem:[%s248 + $0x70] sm:$0xff]
          %v456 = vld [vmem:[%s248 + $0x78] sm:$0xff]
          %v457 = vld [vmem:[%s248 + $0x80] sm:$0xff]
          %v458 = vld [vmem:[%s248 + $0x88] sm:$0xff]
          %v459 = vld [vmem:[%s248 + $0x90] sm:$0xff]
          %v460 = vld [vmem:[%s248 + $0x98] sm:$0xff]
          %v461 = vld [vmem:[%s248 + $0xa0] sm:$0xff]
          %v462 = vld [vmem:[%s248 + $0xa8] sm:$0xff]
          %v463 = vld [vmem:[%s248 + $0xb0] sm:$0xff]
          %v464 = vld [vmem:[%s248 + $0xb8] sm:$0xff]
          %v465 = vld [vmem:[%s248 + $0xc0] sm:$0xff]
          %v466 = vld [vmem:[%s248 + $0xc8] sm:$0xff]
          %v467 = vld [vmem:[%s248 + $0xd0] sm:$0xff]
          %v468 = vld [vmem:[%s248 + $0xd8] sm:$0xff]
          %v469 = vld [vmem:[%s248 + $0xe0] sm:$0xff]
          %v470 = vld [vmem:[%s248 + $0xe8] sm:$0xff]
          %v471 = vld [vmem:[%s248 + $0xf0] sm:$0xff]
          %v472 = vld [vmem:[%s248 + $0xf8] sm:$0xff]
          %473 = vmatprep.subr.mxu0 0.0
          %474 = vmatpush1.msra.mxu0 %v441
          %475 = vmatprep.subr.mxu0 0.0
          %476 = vmatpush1.msra.mxu0 %v442
          %477 = vmatprep.subr.mxu0 0.0
          %478 = vmatpush1.msra.mxu0 %v443
          %479 = vmatprep.subr.mxu0 0.0
          %480 = vmatpush1.msra.mxu0 %v444
          %481 = vmatprep.subr.mxu0 0.0
          %482 = vmatpush1.msra.mxu0 %v445
          %483 = vmatprep.subr.mxu0 0.0
          %484 = vmatpush1.msra.mxu0 %v446
          %485 = vmatprep.subr.mxu0 0.0
          %486 = vmatpush1.msra.mxu0 %v447
          %487 = vmatprep.subr.mxu0 0.0
          %488 = vmatpush1.msra.mxu0 %v448
          %489 = vmatprep.subr.mxu0 0.0
          %490 = vmatpush1.msra.mxu0 %v449
          %491 = vmatprep.subr.mxu0 0.0
          %492 = vmatpush1.msra.mxu0 %v450
          %493 = vmatprep.subr.mxu0 0.0
          %494 = vmatpush1.msra.mxu0 %v451
          %495 = vmatprep.subr.mxu0 0.0
          %496 = vmatpush1.msra.mxu0 %v452
          %497 = vmatprep.subr.mxu0 0.0
          %498 = vmatpush1.msra.mxu0 %v453
          %499 = vmatprep.subr.mxu0 0.0
          %500 = vmatpush1.msra.mxu0 %v454
          %501 = vmatprep.subr.mxu0 0.0
          %502 = vmatpush1.msra.mxu0 %v455
          %503 = vmatprep.subr.mxu0 0.0
          %504 = vmatpush1.msra.mxu0 %v456
          %505 = vmatprep.subr.mxu0 0.0
          %506 = vmatpush1.msra.mxu0 %v457
          %507 = vmatprep.subr.mxu0 0.0
          %508 = vmatpush1.msra.mxu0 %v458
          %509 = vmatprep.subr.mxu0 0.0
          %510 = vmatpush1.msra.mxu0 %v459
          %511 = vmatprep.subr.mxu0 0.0
          %512 = vmatpush1.msra.mxu0 %v460
          %513 = vmatprep.subr.mxu0 0.0
          %514 = vmatpush1.msra.mxu0 %v461
          %515 = vmatprep.subr.mxu0 0.0
          %516 = vmatpush1.msra.mxu0 %v462
          %517 = vmatprep.subr.mxu0 0.0
          %518 = vmatpush1.msra.mxu0 %v463
          %519 = vmatprep.subr.mxu0 0.0
          %520 = vmatpush1.msra.mxu0 %v464
          %521 = vmatprep.subr.mxu0 0.0
          %522 = vmatpush1.msra.mxu0 %v465
          %523 = vmatprep.subr.mxu0 0.0
          %524 = vmatpush1.msra.mxu0 %v466
          %525 = vmatprep.subr.mxu0 0.0
          %526 = vmatpush1.msra.mxu0 %v467
          %527 = vmatprep.subr.mxu0 0.0
          %528 = vmatpush1.msra.mxu0 %v468
          %529 = vmatprep.subr.mxu0 0.0
          %530 = vmatpush1.msra.mxu0 %v469
          %531 = vmatprep.subr.mxu0 0.0
          %532 = vmatpush1.msra.mxu0 %v470
          %533 = vmatprep.subr.mxu0 0.0
          %534 = vmatpush1.msra.mxu0 %v471
          %535 = vmatprep.subr.mxu0 0.0
          %536 = vmatpush1.msra.mxu0 %v472
          %537 = vmatprep.mubr.f32.mxu0 %v424
          %538 = vmatmul.mubr.f32.gmra.mrb[0].mxu0 %v423
          %v539 = vpop.f32.mrb[0].mxu0
          %v540 = vadd.f32 0.0, %v539
          %v541 = vpop.f32.mrb[0].mxu0
          %542 = vdwg.mxu0
          %v543 = vadd.f32 %v440, %v540
          %544 = vst [vmem:[#allocation2] sm:$0xff] %v543
        $region56: #{tpu_custom_call.1} parent=31 // pred_fallthru
          _
        %p545 = scmp.eq.s32.totalorder %s24, 1
        // Predicated region
        $region57: #{tpu_custom_call.1} parent=31 // pred_check
          %p546 = pneg %p545
        $region58: #{tpu_custom_call.1} parent=31 // pred_check_branch
          %548 = sbr.rel (%p546) target = $region60
        $region59: #{tpu_custom_call.1} parent=31 // pred_region
          %v549 = vld [vmem:[#allocation2] sm:$0xff]
          %550 = vst [vmem:[#allocation10] sm:$0xff] %v549
        $region60: #{tpu_custom_call.1} parent=31 // pred_fallthru
          _
        %s551 = sand.u32 %s115, 1
        %s552 = scalar_lea.sflag [#allocation5], %s551
        %s553 = sand.u32 %s115, 1
        %s554 = smul.addr %s553, 16
        %s555 = scalar_lea.vmem [#allocation9], %s554
        // Predicated region
        $region61: #{tpu_custom_call.1} parent=31 // pred_check
          %p556 = pneg %p125
        $region62: #{tpu_custom_call.1} parent=31 // pred_check_branch
          %558 = sbr.rel (%p556) target = $region64
        $region63: #{tpu_custom_call.1} parent=31 // pred_region
          %p559 = scmp.lt.s32.totalorder %s24, 0
          %s560 = scalar_select %p559, %s24, 0
          %s561 = smul.u32 2, %s560
          %s563 = ssub.s32 256, 256
          %564 = vsyncadd %s552, %s563
          %s565 = smul.addr %s561, 128
          %s566 = scalar_lea.hbm %s3, %s565
          %s568 = sshll.u32 %s555, 4
          %s569 = int_to_ptr.vmem [resolvable:$true] %s568
          %571 = dma.vmem_to_hbm [thread:$0]  %s569, 256, %s566, %s552
        $region64: #{tpu_custom_call.1} parent=31 // pred_fallthru
          _
        // Predicated region
        $region65: #{tpu_custom_call.1} parent=31 // pred_check
          %p572 = pneg %p146
        $region66: #{tpu_custom_call.1} parent=31 // pred_check_branch
          %574 = sbr.rel (%p572) target = $region68
        $region67: #{tpu_custom_call.1} parent=31 // pred_region
          %s576 = ssub.s32 128, 128
          %577 = vsyncadd [#allocation11], %s576
          %s579 = sshll.u32 [#allocation10], 4
          %s580 = int_to_ptr.vmem [resolvable:$true] %s579
          %582 = dma.vmem_to_hbm [thread:$0]  %s580, 128, %s4, [#allocation11]
        $region68: #{tpu_custom_call.1} parent=31 // pred_fallthru
          _
        // Predicated region
        $region69: #{tpu_custom_call.1} parent=31 // pred_check
          %p583 = pneg %p146
        $region70: #{tpu_custom_call.1} parent=31 // pred_check_branch
          %585 = sbr.rel (%p583) target = $region72
        $region71: #{tpu_custom_call.1} parent=31 // pred_region
          %586 = dma.done [#allocation11], 128
        $region72: #{tpu_custom_call.1} parent=31 // pred_fallthru
          _
      $region32: #{tpu_custom_call.1} parent=5 // pred_fallthru
        _
      %p587 = scmp.le.s32.totalorder 2, %s19
      // Predicated region
      $region73: #{tpu_custom_call.1} parent=5 // pred_check
        %p588 = pneg %p587
      $region74: #{tpu_custom_call.1} parent=5 // pred_check_branch
        %590 = sbr.rel (%p588) target = $region76
      $region75: #{tpu_custom_call.1} parent=5 // pred_region
        %s591 = ssub.s32 %s19, 2
        // Predicated region
        $region77: #{tpu_custom_call.1} parent=75 // pred_check
          %p592 = pneg %p131
        $region78: #{tpu_custom_call.1} parent=75 // pred_check_branch
          %594 = sbr.rel (%p592) target = $region80
        $region79: #{tpu_custom_call.1} parent=75 // pred_region
          %s595 = sand.u32 %s116, 1
          %s596 = scalar_lea.sflag [#allocation5], %s595
          %s597 = sand.u32 %s116, 1
          %s598 = smul.addr %s597, 16
          %s599 = scalar_lea.vmem [#allocation9], %s598
          %600 = dma.done %s596, 256
        $region80: #{tpu_custom_call.1} parent=75 // pred_fallthru
          _
      $region76: #{tpu_custom_call.1} parent=5 // pred_fallthru
        _
    $region6: #{tpu_custom_call.1} parent=1 // loop_footer
      %s23 = sadd.s32 1, %s19
    $region7: #{tpu_custom_call.1} parent=1 // loop_footer_branch
      %18 = sbr.rel target = $region3
    $region8: #{tpu_custom_call.1} parent=1 // loop_exit
      _
    %601 = vsyncpa [#allocation4], 1
    %s602 = scalar_lea.sflag [#allocation4], 1
    %603 = vsyncpa %s602, 1
    %604 = vsyncpa [#allocation7], 1
    %s605 = scalar_lea.sflag [#allocation7], 1
    %606 = vsyncpa %s605, 1
    %607 = vsyncpa [#allocation5], 1
    %s608 = scalar_lea.sflag [#allocation5], 1
    %609 = vsyncpa %s608, 1
    %610 = vsyncpa [#allocation11], 1

</llo_original>
